<compile_context>
chip_gen: v7x
topology: tpu7x:2x2x1
jax: 0.10.0
libtpu: 0.0.40
codegen_flags: <defaults>
</compile_context>

<pallas_src>
import functools
import math

import jax
import jax.numpy as jnp
from jax.experimental import pallas as pl
from jax.experimental.pallas import tpu as pltpu


def _round_up(x, m):
    return ((x + m - 1) // m) * m


def _vmem_capacity_bytes():
    """Physical VMEM per TensorCore; conservative default if the probe fails."""
    try:
        cap = getattr(pltpu.get_tpu_info(), "vmem_capacity_bytes", None)
    except Exception:  # benign capacity probe only -> fall back to v7x's 64 MiB
        cap = None
    return int(cap) if cap else (64 << 20)


# ---------------------------------------------------------------------------
# Path 1: VMEM-resident table, one-hot @ table on the MXU (small vocab).
# ---------------------------------------------------------------------------
def _embed_onehot_kernel(ids_ref, table_ref, out_ref, *, mul):
    # ids_ref: (TM, 1) i32 ; table_ref: (V, Dp) f32 (VMEM resident) ; out: (TM, Dp)
    ids = ids_ref[...]
    tm = ids.shape[0]
    vocab = table_ref.shape[0]
    vocab_iota = jax.lax.broadcasted_iota(jnp.int32, (tm, vocab), 1)
    # Fold sqrt(d_model) into the (exact 0/1) one-hot: entries are 0 or mul, so
    # the matmul already produces scaled rows -> no extra (TM, D) VPU multiply.
    onehot = jnp.where(ids == vocab_iota, mul, 0.0).astype(table_ref.dtype)
    # Note: at small V the MXU is deliberately under-filled on v5e/v6e/v7x;
    # this kernel is overhead/DMA-bound, and large V switches to the gather
    # path instead of padding the matmul. Keep f32 (no bf16 cast) for parity.
    out_ref[...] = jnp.dot(onehot, table_ref[...],
                           preferred_element_type=jnp.float32).astype(out_ref.dtype)


def _build_onehot_call(n_pad, tm, V, Dp, dtype, mul, single_buffer_table, vmem_cap):
    table_index_map = lambda i: (0, 0)
    if single_buffer_table:
        # Constant-index resident table: no benefit from double buffering.
        table_spec = pl.BlockSpec((V, Dp), table_index_map,
                                  pipeline_mode=pl.Buffered(1))
        table_bufs = 1
    else:
        table_spec = pl.BlockSpec((V, Dp), table_index_map)
        table_bufs = 2

    itemsize = jnp.dtype(dtype).itemsize
    table_bytes = V * Dp * itemsize
    out_tile_bytes = tm * Dp * itemsize
    ids_tile_bytes = tm * 4
    onehot_bytes = tm * V * 4
    # Actual footprint + modest headroom: no artificial 32 MiB floor, and the
    # upper cap is derived from physical VMEM (e.g. 48 MiB on v7x's 64 MiB).
    vmem_needed = (table_bufs * table_bytes
                   + 2 * (out_tile_bytes + ids_tile_bytes)
                   + onehot_bytes + (4 << 20))
    vmem_limit = int(min(vmem_needed, vmem_cap - (16 << 20)))

    cost = pl.CostEstimate(
        flops=2 * n_pad * V * Dp,
        transcendentals=0,
        bytes_accessed=n_pad * 4 + table_bytes + n_pad * Dp * itemsize)

    return pl.pallas_call(
        functools.partial(_embed_onehot_kernel, mul=mul),
        out_shape=jax.ShapeDtypeStruct((n_pad, Dp), dtype),
        grid_spec=pltpu.PrefetchScalarGridSpec(
            num_scalar_prefetch=0,
            grid=(n_pad // tm,),
            in_specs=[pl.BlockSpec((tm, 1), lambda i: (i, 0)),   # token-id tile
                      table_spec],                               # resident table
            out_specs=pl.BlockSpec((tm, Dp), lambda i: (i, 0))),
        compiler_params=pltpu.CompilerParams(
            dimension_semantics=("parallel",),
            vmem_limit_bytes=vmem_limit),
        cost_estimate=cost)


# ---------------------------------------------------------------------------
# Path 2: table in HBM, scalar-prefetched ids + pipelined row-gather DMAs.
# ---------------------------------------------------------------------------
def _embed_gather_kernel(ids_ref, table_ref, out_ref, acc_ref, sems,
                         *, mul, tm, nsem):
    # ids_ref  : (n_pad,) i32 in SMEM (scalar-prefetched)
    # table_ref: (V, Dp) in HBM (memory_space=pl.ANY)
    # out_ref  : (TM, Dp) VMEM output tile
    # acc_ref  : (TM, Dp) VMEM scratch, filled row-by-row via DMA
    # sems     : (nsem,) DMA semaphores -> up to `nsem` row fetches in flight
    base = pl.program_id(0) * tm
    vocab = table_ref.shape[0]

    def row_copy(j, row):
        return pltpu.make_async_copy(
            table_ref.at[pl.ds(row, 1), :],
            acc_ref.at[pl.ds(j, 1), :],
            sems.at[j % nsem])

    @pl.loop(0, tm)
    def _issue(j):
        @pl.when(j >= nsem)
        def _():
            row_copy(j - nsem, 0).wait()      # retire the copy using this slot
        row = ids_ref[base + j]
        row = jnp.minimum(jnp.maximum(row, 0), vocab - 1)   # clamp OOB ids
        row_copy(j, row).start()

    @pl.loop(max(tm - nsem, 0), tm)
    def _drain(j):
        row_copy(j, 0).wait()

    out_ref[...] = (acc_ref[...] * mul).astype(out_ref.dtype)


def _build_gather_call(n_pad, tm, V, Dp, dtype, mul, vmem_cap, nsem):
    itemsize = jnp.dtype(dtype).itemsize
    out_tile_bytes = tm * Dp * itemsize
    acc_bytes = tm * Dp * itemsize
    vmem_needed = 2 * out_tile_bytes + acc_bytes + (4 << 20)
    vmem_limit = int(min(vmem_needed, vmem_cap - (16 << 20)))

    cost = pl.CostEstimate(
        flops=n_pad * Dp,                       # just the scale multiply
        transcendentals=0,
        bytes_accessed=n_pad * 4 + 2 * n_pad * Dp * itemsize)

    return pl.pallas_call(
        functools.partial(_embed_gather_kernel, mul=mul, tm=tm, nsem=nsem),
        out_shape=jax.ShapeDtypeStruct((n_pad, Dp), dtype),
        grid_spec=pltpu.PrefetchScalarGridSpec(
            num_scalar_prefetch=1,              # flattened ids -> SMEM
            grid=(n_pad // tm,),
            in_specs=[pl.BlockSpec(memory_space=pl.ANY)],   # table stays in HBM
            out_specs=pl.BlockSpec((tm, Dp), lambda i, ids: (i, 0)),
            scratch_shapes=[pltpu.VMEM((tm, Dp), dtype),
                            pltpu.SemaphoreType.DMA((nsem,))]),
        compiler_params=pltpu.CompilerParams(
            dimension_semantics=("parallel",),
            vmem_limit_bytes=vmem_limit),
        cost_estimate=cost)


# ---------------------------------------------------------------------------
# Wrapper
# ---------------------------------------------------------------------------
def embeddings_forward(x_ids, table, *, tm=512, path="auto"):
    """x_ids: (B, S) int; table: (V, D) float -> (B, S, D) float."""
    B, S = x_ids.shape
    V, D = table.shape
    mul = math.sqrt(D)
    dtype = table.dtype
    itemsize = jnp.dtype(dtype).itemsize
    n = B * S

    # Lane-dense output: pad d_model up to a multiple of 128 (padded columns
    # are zero and sliced off below) so stores are full-lane vst, not vst.msk.
    Dp = _round_up(D, 128)
    table_p = table if Dp == D else jnp.pad(table, ((0, 0), (0, Dp - D)))

    # Token tile: large (default 512) to amortize ~0.35us/step grid overhead,
    # clamped so tiny inputs don't over-pad, kept a multiple of 8, and split
    # into >= 2 grid steps when possible so v7x's two TensorCores both work.
    tm_eff = min(tm, _round_up(n, 8))
    if n > 8:
        tm_eff = min(tm_eff, _round_up(pl.cdiv(n, 2), 8))
    tm_eff = max(8, _round_up(tm_eff, 8))
    n_pad = _round_up(n, tm_eff)

    ids_flat = x_ids.reshape(n).astype(jnp.int32)
    if n_pad != n:
        ids_flat = jnp.pad(ids_flat, (0, n_pad - n))   # pad id 0; sliced off

    # Generation-aware dispatch: keep the table VMEM-resident (one-hot MXU
    # path) only if it fits ~70% of this chip's VMEM and the vocab is small
    # enough that the O(N*V*D) one-hot matmul is not the bottleneck.
    vmem_cap = _vmem_capacity_bytes()
    resident_bytes = (V * Dp * itemsize
                      + 2 * (tm_eff * Dp * itemsize + tm_eff * 4)
                      + tm_eff * V * 4)
    if path == "auto":
        use_onehot = (V <= 2048) and (resident_bytes <= int(0.7 * vmem_cap))
    elif path == "onehot":
        use_onehot = True
    elif path == "gather":
        use_onehot = False
    else:
        raise ValueError(f"unknown path: {path!r}")

    if use_onehot:
        ids_2d = ids_flat.reshape(n_pad, 1)
        try:
            out_flat = _build_onehot_call(n_pad, tm_eff, V, Dp, dtype, mul,
                                          single_buffer_table=True,
                                          vmem_cap=vmem_cap)(ids_2d, table_p)
        except (pltpu.LoweringException, ValueError, NotImplementedError,
                TypeError):
            # Narrow fallback: only for builds/lowerings that reject
            # pipeline_mode=pl.Buffered(1); genuine runtime errors propagate.
            out_flat = _build_onehot_call(n_pad, tm_eff, V, Dp, dtype, mul,
                                          single_buffer_table=False,
                                          vmem_cap=vmem_cap)(ids_2d, table_p)
    else:
        nsem = min(8, tm_eff)
        out_flat = _build_gather_call(n_pad, tm_eff, V, Dp, dtype, mul,
                                      vmem_cap, nsem)(ids_flat, table_p)

    return out_flat[:n, :D].reshape(B, S, D)


if __name__ == "__main__":
    # Small deterministic setup consistent with the module:
    # d_model=128, vocab_size=64, batch=2, seq=8.
    d_model = 128
    vocab_size = 64
    B, S = 2, 8

    key = jax.random.PRNGKey(0)
    k_tab, k_ids = jax.random.split(key)

    # Deterministic "parameter" init (nn.Embedding default is N(0,1)).
    table = jax.random.normal(k_tab, (vocab_size, d_model), dtype=jnp.float32)
    x_ids = jax.random.randint(k_ids, (B, S), 0, vocab_size, dtype=jnp.int32)

    ref = table[x_ids] * math.sqrt(d_model)

    # Auto dispatch -> VMEM-resident one-hot (MXU) path for this tiny vocab.
    out = jax.block_until_ready(embeddings_forward(x_ids, table))
    assert out.shape == (B, S, d_model)
    assert jnp.allclose(out, ref, atol=1e-5, rtol=1e-5)

    # Also exercise the HBM row-gather path (what large vocabs / v7x would use).
    out_g = jax.block_until_ready(embeddings_forward(x_ids, table, path="gather"))
    assert out_g.shape == (B, S, d_model)
    assert jnp.allclose(out_g, ref, atol=1e-5, rtol=1e-5)

    print("KERNEL_OK")
</pallas_src>

<mosaic_0001>
module attributes {stable_mosaic.version = 11 : i64} {
  func.func @_embed_onehot_kernel(%arg0: i32, %arg1: memref<8x1xi32, #tpu.memory_space<vmem>>, %arg2: memref<64x128xf32, #tpu.memory_space<vmem>>, %arg3: memref<8x128xf32, #tpu.memory_space<vmem>>) attributes {dimension_semantics = [#tpu.dimension_semantics<parallel>], iteration_bounds = array<i64: 2>, scalar_prefetch = 0 : i64, scratch_operands = 0 : i64, tpu.core_type = #tpu.core_type<tc>, window_params = [{transform_indices = @transform_0, window_bounds = array<i64: 8, 1>}, {pipeline_mode = #tpu.pipeline_mode<synchronous>, transform_indices = @transform_1, window_bounds = array<i64: 64, 128>}, {transform_indices = @transform_2, window_bounds = array<i64: 8, 128>}]} {
    %c0 = arith.constant 0 : index
    %c0_0 = arith.constant 0 : index
    %0 = vector.load %arg1[%c0, %c0_0] : memref<8x1xi32, #tpu.memory_space<vmem>>, vector<8x1xi32>
    %1 = tpu.iota {dimensions = array<i32: 1>} : vector<8x64xi32>
    %2 = vector.broadcast %0 : vector<8x1xi32> to vector<8x64xi32>
    %3 = arith.cmpi eq, %2, %1 : vector<8x64xi32>
    %cst = arith.constant 11.3137083 : f32
    %cst_1 = arith.constant 0.000000e+00 : f32
    %4 = vector.broadcast %cst : f32 to vector<8x64xf32>
    %5 = vector.broadcast %cst_1 : f32 to vector<8x64xf32>
    %6 = arith.select %3, %4, %5 : vector<8x64xi1>, vector<8x64xf32>
    %c0_2 = arith.constant 0 : index
    %c0_3 = arith.constant 0 : index
    %7 = vector.load %arg2[%c0_2, %c0_3] : memref<64x128xf32, #tpu.memory_space<vmem>>, vector<64x128xf32>
    %cst_4 = arith.constant dense<0.000000e+00> : vector<8x128xf32>
    %8 = tpu.matmul %6, %7, %cst_4 {dimension_numbers = #tpu.dot_dimension_numbers<[1], [0], [0], [1], [0, 0, 1, 1], [], []>} : vector<8x64xf32>, vector<64x128xf32>, vector<8x128xf32> -> vector<8x128xf32>
    %c0_5 = arith.constant 0 : index
    %c0_6 = arith.constant 0 : index
    %9 = vector.load %arg3[%c0_5, %c0_6] : memref<8x128xf32, #tpu.memory_space<vmem>>, vector<8x128xf32>
    tpu.vector_store %arg3[%c0_5, %c0_6], %8 {strides = array<i32>} : memref<8x128xf32, #tpu.memory_space<vmem>>, vector<8x128xf32>,
    return
  }
  func.func @transform_0(%arg0: i32) -> (i32, i32) {
    %c0_i32 = arith.constant 0 : i32
    %c0_i32_0 = arith.constant 0 : i32
    return %arg0, %c0_i32 : i32, i32
  }
  func.func @transform_1(%arg0: i32) -> (i32, i32) {
    %c0_i32 = arith.constant 0 : i32
    %c0_i32_0 = arith.constant 0 : i32
    %c0_i32_1 = arith.constant 0 : i32
    return %c0_i32, %c0_i32_0 : i32, i32
  }
  func.func @transform_2(%arg0: i32) -> (i32, i32) {
    %c0_i32 = arith.constant 0 : i32
    %c0_i32_0 = arith.constant 0 : i32
    return %arg0, %c0_i32 : i32, i32
  }
}

</mosaic_0001>

<llo_original>
// kernel: tpu_custom_call.1
$region0: #{tpu_custom_call.1}
  #allocation0 [shape = 'u32[]', space=smem, size = 0x4, offset = 0x4, fixed_abs, tag = 'smem constant byte address 0x4 - core index']
  #allocation1 [shape = 'u32[144,128]{1,0:T(1,128)}', space=vmem, size = 0x12000, scoped, tag = 'internal scratch']
  %s0 = inlined_call_operand.vmem [shape: s32[16,1], index: 0, kind: input, shape index: {}]
  %s1 = inlined_call_operand.hbm [shape: f32[64,128], index: 1, kind: input, shape index: {}]
  %s2 = inlined_call_operand.hbm [shape: f32[16,128], index: 2, kind: output, shape index: {}]
  %s3 = sld [smem:[#allocation0]]
  $region45: #{tpu_custom_call.1} parent=0
    _
  %s5 = ssub.s32 1, %s3
  %s6 = scalar_select 0, %s5, %s3
  $region1: #{tpu_custom_call.1} parent=0
    #allocation2 [shape = 'u8[32768]{0}', space=vmem, size = 0x8000, scoped, tag = 'input window, operand 1, single buffered']
    #allocation3 [shape = 's32[2]{0}', space=sflag, size = 0x8, scoped, tag = 'scoped memory for tpu_custom_call.1']
    #allocation4 [shape = 's32[2]{0}', space=sflag, size = 0x8, scoped, tag = 'scoped memory for tpu_custom_call.1']
    #allocation5 [shape = 'u8[8192]{0}', space=vmem, size = 0x2000, scoped, tag = 'output window, operand 0']
    %7 = vsyncpa [#allocation3], 0
    %8 = vsyncpa [#allocation4], 0
    %s9 = scalar_lea.sflag [#allocation4], 1
    %10 = vsyncpa %s9, 0
    loop: start=0, step=1, limit=4
    $region2: #{tpu_custom_call.1} parent=1 // loop_pre_header
      _
    $region3: #{tpu_custom_call.1} parent=1 // loop_header
      %s12 = sphi 0, %s16
      %p13 = scmp.ge.s32.totalorder %s12, 4
      %s22 = sphi 0, %s24
      %s25 = sphi 0, %s22
      %s26 = sphi 0, %s25
      %s42 = sphi 0, %s26
      %s46 = sphi 0, %s46
      %s48 = sphi 0, %s46
      %s49 = sphi 0, %s48
      %s63 = sphi 0, %s49
      %s69 = sphi 0, %s71
      %s72 = sphi 0, %s69
      %s73 = sphi 0, %s72
      %s89 = sphi 0, %s73
    $region4: #{tpu_custom_call.1} parent=1 // loop_header_branch
      %15 = sbr.rel (%p13) target = $region8
    $region5: #{tpu_custom_call.1} parent=1 // loop_body
      %s17 = ssub.s32 %s12, 1
      %s18 = ssub.s32 %s12, 2
      %s19 = sadd.s32 %s12, 1
      %s20 = ssub.s32 %s12, %s19
      %p21 = scmp.eq.s32.totalorder %s20, 0
      %s23 = sadd.s32 %s22, 1
      %s24 = scalar_select %p21, %s22, %s23
      %p27 = pneg %p21
      %p28 = scmp.eq.s32.totalorder %s12, 1
      %p29 = por %p27, %p28
      %p30 = scmp.ne.s32.totalorder %s22, %s25
      %p31 = scmp.eq.s32.totalorder %s12, 0
      %p32 = por %p30, %p31
      %p33 = scmp.ne.s32.totalorder %s22, %s25
      %p34 = scmp.eq.s32.totalorder %s17, 1
      %p35 = por %p33, %p34
      %p36 = scmp.ne.s32.totalorder %s25, %s26
      %p37 = scmp.eq.s32.totalorder %s17, 0
      %p38 = por %p36, %p37
      %p39 = scmp.ne.s32.totalorder %s25, %s26
      %p40 = scmp.eq.s32.totalorder %s18, 1
      %p41 = por %p39, %p40
      %p43 = scmp.ne.s32.totalorder %s26, %s42
      %p44 = scmp.eq.s32.totalorder %s18, 0
      %p45 = por %p43, %p44
      %s47 = sadd.s32 %s46, 1
      %p50 = scmp.eq.s32.totalorder %s12, 1
      %p51 = scmp.ne.s32.totalorder %s46, %s48
      %p52 = scmp.eq.s32.totalorder %s12, 0
      %p53 = por %p51, %p52
      %p54 = scmp.ne.s32.totalorder %s46, %s48
      %p55 = scmp.eq.s32.totalorder %s17, 1
      %p56 = por %p54, %p55
      %p57 = scmp.ne.s32.totalorder %s48, %s49
      %p58 = scmp.eq.s32.totalorder %s17, 0
      %p59 = por %p57, %p58
      %p60 = scmp.ne.s32.totalorder %s48, %s49
      %p61 = scmp.eq.s32.totalorder %s18, 1
      %p62 = por %p60, %p61
      %p64 = scmp.ne.s32.totalorder %s49, %s63
      %p65 = scmp.eq.s32.totalorder %s18, 0
      %p66 = por %p64, %p65
      %s67 = ssub.s32 %s12, %s19
      %p68 = scmp.eq.s32.totalorder %s67, 0
      %s70 = sadd.s32 %s69, 1
      %s71 = scalar_select %p68, %s69, %s70
      %p74 = pneg %p68
      %p75 = scmp.eq.s32.totalorder %s12, 1
      %p76 = por %p74, %p75
      %p77 = scmp.ne.s32.totalorder %s69, %s72
      %p78 = scmp.eq.s32.totalorder %s12, 0
      %p79 = por %p77, %p78
      %p80 = scmp.ne.s32.totalorder %s69, %s72
      %p81 = scmp.eq.s32.totalorder %s17, 1
      %p82 = por %p80, %p81
      %p83 = scmp.ne.s32.totalorder %s72, %s73
      %p84 = scmp.eq.s32.totalorder %s17, 0
      %p85 = por %p83, %p84
      %p86 = scmp.ne.s32.totalorder %s72, %s73
      %p87 = scmp.eq.s32.totalorder %s18, 1
      %p88 = por %p86, %p87
      %p90 = scmp.ne.s32.totalorder %s73, %s89
      %p91 = scmp.eq.s32.totalorder %s18, 0
      %p92 = por %p90, %p91
      %p93 = scmp.le.s32.totalorder 1, %s12
      %p94 = scmp.lt.s32.totalorder %s12, 3
      %p95 = pnand %p93, %p94
      %p96 = pneg %p95
      // Predicated region
      $region9: #{tpu_custom_call.1} parent=5 // pred_check
        _
      $region10: #{tpu_custom_call.1} parent=5 // pred_check_branch
        %98 = sbr.rel (%p95) target = $region12
      $region11: #{tpu_custom_call.1} parent=5 // pred_region
        %s99 = ssub.s32 %s12, 1
        // Predicated region
        $region13: #{tpu_custom_call.1} parent=11 // pred_check
          %p100 = pneg %p59
        $region14: #{tpu_custom_call.1} parent=11 // pred_check_branch
          %102 = sbr.rel (%p100) target = $region16
        $region15: #{tpu_custom_call.1} parent=11 // pred_region
          %s104 = ssub.s32 1024, 1024
          %105 = vsyncadd [#allocation3], %s104
          %s106 = sshll.u32 [#allocation2], 4
          %s107 = int_to_ptr.vmem [resolvable:$true] %s106
          %112 = dma.hbm_to_vmem [thread:$0]  %s1, 1024, %s107, [#allocation3], 128, 128, 8
        $region16: #{tpu_custom_call.1} parent=11 // pred_fallthru
          _
      $region12: #{tpu_custom_call.1} parent=5 // pred_fallthru
        _
      %p113 = scmp.lt.s32.totalorder %s12, 2
      // Predicated region
      $region17: #{tpu_custom_call.1} parent=5 // pred_check
        %p114 = pneg %p113
      $region18: #{tpu_custom_call.1} parent=5 // pred_check_branch
        %116 = sbr.rel (%p114) target = $region20
      $region19: #{tpu_custom_call.1} parent=5 // pred_region
        // Predicated region
        $region21: #{tpu_custom_call.1} parent=19 // pred_check
          %p117 = pneg %p32
        $region22: #{tpu_custom_call.1} parent=19 // pred_check_branch
          %119 = sbr.rel (%p117) target = $region24
        $region23: #{tpu_custom_call.1} parent=19 // pred_region
          %p120 = scmp.lt.s32.totalorder %s12, 1
          %s121 = scalar_select %p120, %s12, 1
          %s122 = smul.addr %s121, 8
          %s123 = scalar_lea.vmem %s0, %s122
        $region24: #{tpu_custom_call.1} parent=19 // pred_fallthru
          _
      $region20: #{tpu_custom_call.1} parent=5 // pred_fallthru
        _
      %p124 = scmp.le.s32.totalorder 1, %s12
      %p125 = scmp.lt.s32.totalorder %s12, 3
      %p126 = pnand %p124, %p125
      %p127 = pneg %p126
      // Predicated region
      $region25: #{tpu_custom_call.1} parent=5 // pred_check
        _
      $region26: #{tpu_custom_call.1} parent=5 // pred_check_branch
        %129 = sbr.rel (%p126) target = $region28
      $region27: #{tpu_custom_call.1} parent=5 // pred_region
        %s130 = ssub.s32 %s12, 1
        // Predicated region
        $region29: #{tpu_custom_call.1} parent=27 // pred_check
          %p131 = pneg %p59
        $region30: #{tpu_custom_call.1} parent=27 // pred_check_branch
          %133 = sbr.rel (%p131) target = $region32
        $region31: #{tpu_custom_call.1} parent=27 // pred_region
          %134 = dma.done [#allocation3], 1024
        $region32: #{tpu_custom_call.1} parent=27 // pred_fallthru
          _
        %p135 = scmp.lt.s32.totalorder %s17, 1
        %s136 = scalar_select %p135, %s17, 1
        %s137 = smul.addr %s136, 8
        %s138 = scalar_lea.vmem %s0, %s137
        %p139 = pneg %p38
        %p140 = pneg %p35
        %p141 = pneg %p59
        %p142 = pneg %p56
        %p143 = pneg %p85
        %p144 = pneg %p82
        %s145 = sand.u32 %s72, 1
        %s146 = scalar_lea.sflag [#allocation4], %s145
        %s147 = sand.u32 %s72, 1
        %s148 = smul.addr %s147, 8
        %s149 = scalar_lea.vmem [#allocation5], %s148
        %p150 = scmp.lt.s32.totalorder %s17, 1
        %s151 = scalar_select %p150, %s17, 1
        %s152 = smul.addr %s151, 8
        %s153 = scalar_lea.vmem %s0, %s152
        %v154 = vld [vmem:[%s153] sm:$0xff]
        %v155 = vlaneseq
        %v156 = vand.u32 %v155, 127
        %157 = vset.pattern.permute.xlu0 0
        %158 = vperm.xlu0 %157, %v154
        %v159 = vpop.permute.xlu0 %158
        %vm160 = vcmp.eq.s32.totalorder %v159, %v156
        %v161 = vsel %vm160, 11.313708, 0.0
        %v162 = vld [vmem:[#allocation2] sm:$0xff]
        %v163 = vld [vmem:[#allocation2 + $0x8] sm:$0xff]
        %v164 = vld [vmem:[#allocation2 + $0x10] sm:$0xff]
        %v165 = vld [vmem:[#allocation2 + $0x18] sm:$0xff]
        %v166 = vld [vmem:[#allocation2 + $0x20] sm:$0xff]
        %v167 = vld [vmem:[#allocation2 + $0x28] sm:$0xff]
        %v168 = vld [vmem:[#allocation2 + $0x30] sm:$0xff]
        %v169 = vld [vmem:[#allocation2 + $0x38] sm:$0xff]
        %vm170 = vcmask 523264
        %v172 = vsel %vm170, %v161, 0
        %174 = vmatprep.subr.mxu0 0.0
        %175 = vmatpush1.msra.mxu0 %v162
        %176 = vmatprep.subr.mxu0 0.0
        %177 = vmatpush1.msra.mxu0 %v163
        %178 = vmatprep.subr.mxu0 0.0
        %179 = vmatpush1.msra.mxu0 %v164
        %180 = vmatprep.subr.mxu0 0.0
        %181 = vmatpush1.msra.mxu0 %v165
        %182 = vmatprep.subr.mxu0 0.0
        %183 = vmatpush1.msra.mxu0 %v166
        %184 = vmatprep.subr.mxu0 0.0
        %185 = vmatpush1.msra.mxu0 %v167
        %186 = vmatprep.subr.mxu0 0.0
        %187 = vmatpush1.msra.mxu0 %v168
        %188 = vmatprep.subr.mxu0 0.0
        %189 = vmatpush1.msra.mxu0 %v169
        %190 = vmatprep.subr.mxu0 0.0
        %191 = vmatpush1.msra.mxu0 0.0
        %192 = vmatprep.subr.mxu0 0.0
        %193 = vmatpush1.msra.mxu0 0.0
        %194 = vmatprep.subr.mxu0 0.0
        %195 = vmatpush1.msra.mxu0 0.0
        %196 = vmatprep.subr.mxu0 0.0
        %197 = vmatpush1.msra.mxu0 0.0
        %198 = vmatprep.subr.mxu0 0.0
        %199 = vmatpush1.msra.mxu0 0.0
        %200 = vmatprep.subr.mxu0 0.0
        %201 = vmatpush1.msra.mxu0 0.0
        %202 = vmatprep.subr.mxu0 0.0
        %203 = vmatpush1.msra.mxu0 0.0
        %204 = vmatprep.subr.mxu0 0.0
        %205 = vmatpush1.msra.mxu0 0.0
        %206 = vmatprep.subr.mxu0 0.0
        %207 = vmatpush1.msra.mxu0 0.0
        %208 = vmatprep.subr.mxu0 0.0
        %209 = vmatpush1.msra.mxu0 0.0
        %210 = vmatprep.subr.mxu0 0.0
        %211 = vmatpush1.msra.mxu0 0.0
        %212 = vmatprep.subr.mxu0 0.0
        %213 = vmatpush1.msra.mxu0 0.0
        %214 = vmatprep.subr.mxu0 0.0
        %215 = vmatpush1.msra.mxu0 0.0
        %216 = vmatprep.subr.mxu0 0.0
        %217 = vmatpush1.msra.mxu0 0.0
        %218 = vmatprep.subr.mxu0 0.0
        %219 = vmatpush1.msra.mxu0 0.0
        %220 = vmatprep.subr.mxu0 0.0
        %221 = vmatpush1.msra.mxu0 0.0
        %222 = vmatprep.subr.mxu0 0.0
        %223 = vmatpush1.msra.mxu0 0.0
        %224 = vmatprep.subr.mxu0 0.0
        %225 = vmatpush1.msra.mxu0 0.0
        %226 = vmatprep.subr.mxu0 0.0
        %227 = vmatpush1.msra.mxu0 0.0
        %228 = vmatprep.subr.mxu0 0.0
        %229 = vmatpush1.msra.mxu0 0.0
        %230 = vmatprep.subr.mxu0 0.0
        %231 = vmatpush1.msra.mxu0 0.0
        %232 = vmatprep.subr.mxu0 0.0
        %233 = vmatpush1.msra.mxu0 0.0
        %234 = vmatprep.subr.mxu0 0.0
        %235 = vmatpush1.msra.mxu0 0.0
        %236 = vmatprep.subr.mxu0 0.0
        %237 = vmatpush1.msra.mxu0 0.0
        %238 = vmatprep.mubr.f32.mxu0 0.0
        %239 = vmatmul.mubr.f32.gmra.mrb[0].mxu0 %v172
        %v240 = vpop.f32.mrb[0].mxu0
        %v241 = vadd.f32 0.0, %v240
        %v242 = vpop.f32.mrb[0].mxu0
        %243 = vdwg.mxu0
        %244 = vst [vmem:[%s149] sm:$0xff] %v241
        %s245 = sand.u32 %s72, 1
        %s246 = scalar_lea.sflag [#allocation4], %s245
        %s247 = sand.u32 %s72, 1
        %s248 = smul.addr %s247, 8
        %s249 = scalar_lea.vmem [#allocation5], %s248
        // Predicated region
        $region33: #{tpu_custom_call.1} parent=27 // pred_check
          %p250 = pneg %p82
        $region34: #{tpu_custom_call.1} parent=27 // pred_check_branch
          %252 = sbr.rel (%p250) target = $region36
        $region35: #{tpu_custom_call.1} parent=27 // pred_region
          %s254 = ssub.s32 128, 128
          %255 = vsyncadd %s246, %s254
          %s256 = smul.addr %s17, 128
          %s257 = scalar_lea.hbm %s2, %s256
          %s259 = sshll.u32 %s249, 4
          %s260 = int_to_ptr.vmem [resolvable:$true] %s259
          %262 = dma.vmem_to_hbm [thread:$0]  %s260, 128, %s257, %s246
        $region36: #{tpu_custom_call.1} parent=27 // pred_fallthru
          _
      $region28: #{tpu_custom_call.1} parent=5 // pred_fallthru
        _
      %p263 = scmp.le.s32.totalorder 2, %s12
      // Predicated region
      $region37: #{tpu_custom_call.1} parent=5 // pred_check
        %p264 = pneg %p263
      $region38: #{tpu_custom_call.1} parent=5 // pred_check_branch
        %266 = sbr.rel (%p264) target = $region40
      $region39: #{tpu_custom_call.1} parent=5 // pred_region
        %s267 = ssub.s32 %s12, 2
        // Predicated region
        $region41: #{tpu_custom_call.1} parent=39 // pred_check
          %p268 = pneg %p88
        $region42: #{tpu_custom_call.1} parent=39 // pred_check_branch
          %270 = sbr.rel (%p268) target = $region44
        $region43: #{tpu_custom_call.1} parent=39 // pred_region
          %s271 = sand.u32 %s73, 1
          %s272 = scalar_lea.sflag [#allocation4], %s271
          %s273 = sand.u32 %s73, 1
          %s274 = smul.addr %s273, 8
          %s275 = scalar_lea.vmem [#allocation5], %s274
          %276 = dma.done %s272, 128
        $region44: #{tpu_custom_call.1} parent=39 // pred_fallthru
          _
      $region40: #{tpu_custom_call.1} parent=5 // pred_fallthru
        _
    $region6: #{tpu_custom_call.1} parent=1 // loop_footer
      %s16 = sadd.s32 1, %s12
    $region7: #{tpu_custom_call.1} parent=1 // loop_footer_branch
      %11 = sbr.rel target = $region3
    $region8: #{tpu_custom_call.1} parent=1 // loop_exit
      _
    %277 = vsyncpa [#allocation3], 1
    %s278 = scalar_lea.sflag [#allocation3], 1
    %279 = vsyncpa %s278, 1
    %280 = vsyncpa [#allocation4], 1
    %s281 = scalar_lea.sflag [#allocation4], 1
    %282 = vsyncpa %s281, 1

</llo_original>
